<compile_context>
chip_gen: v7x
topology: tpu7x:2x2x1
jax: 0.10.0
libtpu: 0.0.40
codegen_flags: <defaults>
</compile_context>

<pallas_src>
import functools

import jax
import jax.numpy as jnp
import numpy as np
from jax.experimental import pallas as pl
from jax.experimental.pallas import tpu as pltpu


def _batch_loss_kernel(w_ref, p_ref, out_ref, *, commission_ratio,
                       interest_rate, batch):
    W = w_ref[...].astype(jnp.float32)          # (B, M) portfolio weights
    P = p_ref[...].astype(jnp.float32)          # (B, M) close-price relatives

    row = jax.lax.broadcasted_iota(jnp.int32, (batch, 1), 0)       # (B, 1)

    # element_reward = w * close_price ; reward0[b] = <w_b, y_b>.
    wp = W * P                                                     # (B, M)
    reward0 = jnp.sum(wp, axis=-1, keepdims=True)                  # (B, 1)

    # interest: only negative element rewards contribute.
    interest = jnp.sum(jnp.minimum(wp, 0.0), axis=-1,
                       keepdims=True) * interest_rate              # (B, 1)

    # commission on turnover: future_omega = w*y/reward vs. the next step's w.
    fo = wp * pl.reciprocal(reward0, approx=True)                  # (B, M)
    fo_prev = pltpu.roll(fo, shift=1, axis=0)                      # row b = fo[b-1]
    turn = jnp.sum(jnp.abs(fo_prev - W), axis=-1, keepdims=True)   # (B, 1)
    pure_pc = jnp.where(row == 0, 1.0, 1.0 - turn * commission_ratio)
    reward = reward0 * pure_pc + interest                          # (B, 1)

    logr = jnp.log(reward)                                         # (B, 1)

    # Fused Hillis-Steele scan: s[i] = cumsum(logr)[i],
    #                           m[i] = max_{j<=i} cumsum(logr)[j].
    s = logr
    m = logr
    off = 1
    while off < batch:
        mask = row >= off
        s_l = jnp.where(mask, pltpu.roll(s, shift=off, axis=0), 0.0)
        m_l = jnp.where(mask, pltpu.roll(m, shift=off, axis=0), -jnp.inf)
        m = jnp.maximum(m_l, s_l + m)
        s = s + s_l
        off *= 2
    # TODO(synk): for B > 8, run this scan with batch on the lane axis ((1, B)
    # layout, lane rotates) so the scan state stays inside a single vreg.

    # Scan-tail reuse: total log-return -> loss and portfolio value.
    sum_logr = jax.lax.slice(s, (batch - 1, 0), (batch, 1))        # (1, 1)
    loss = -sum_logr * (1.0 / batch)
    pv = jnp.exp(sum_logr)                                         # prod(reward)

    # Max drawdown fully in log space (bounded in [0, 1), no reciprocal).
    dd = 1.0 - jnp.exp(s - m)                                      # (B, 1)
    mdd = jnp.max(dd, axis=0, keepdims=True)                       # (1, 1)

    # Sharpe ratio (torch.std default is unbiased -> divide by B-1).
    sr = reward - 1.0
    sr_mean = jnp.sum(sr, keepdims=True) * (1.0 / batch)           # (1, 1)
    inv_bm1 = 1.0 / (batch - 1) if batch > 1 else jnp.nan          # torch: NaN at B=1
    sr_var = jnp.sum((sr - sr_mean) ** 2, keepdims=True) * inv_bm1
    SR = sr_mean * jax.lax.rsqrt(sr_var)

    # Single lane-dense store: lanes 0..3 hold loss / pv / SR / mdd.
    lane = jax.lax.broadcasted_iota(jnp.int32, (1, 128), 1)
    out_ref[...] = jnp.where(lane == 0, loss,
                   jnp.where(lane == 1, pv,
                   jnp.where(lane == 2, SR, mdd)))


@functools.partial(jax.jit, static_argnames=("commission_ratio", "interest_rate"))
def batch_loss_pallas(w, y, *, commission_ratio, interest_rate):
    """Returns (loss, portfolio_value, SR, MDD) like Batch_Loss.forward."""
    B, one, M = w.shape
    assert one == 1 and y.shape == (B, M, 1)
    # Reshape only (free for contiguous arrays); f32 cast happens in-kernel.
    W = w.reshape(B, M)
    P = y.reshape(B, M)

    kernel = functools.partial(_batch_loss_kernel,
                               commission_ratio=float(commission_ratio),
                               interest_rate=float(interest_rate),
                               batch=B)

    out = pl.pallas_call(
        kernel,
        out_shape=jax.ShapeDtypeStruct((1, 128), jnp.float32),
        in_specs=[pl.BlockSpec(memory_space=pltpu.MemorySpace.VMEM),
                  pl.BlockSpec(memory_space=pltpu.MemorySpace.VMEM)],
        out_specs=pl.BlockSpec(memory_space=pltpu.MemorySpace.VMEM),
    )(W, P)

    loss = out[0, 0]
    pv = out[0, 1].reshape(1, 1)      # torch returns a (1, 1) tensor
    sr = out[0, 2]
    mdd = out[0, 3]
    return loss, pv, sr, mdd


def batch_loss_reference(w, y, commission_ratio, interest_rate):
    """Pure numpy replica of the PyTorch forward (for validation only)."""
    w = np.asarray(w, np.float32)
    y = np.asarray(y, np.float32)
    B, _, M = w.shape
    reward = np.matmul(w, y)                                   # (B,1,1)
    cp = y.reshape(B, 1, M)
    er = w * cp
    interest = np.where(er < 0, er, 0.0).sum(axis=2, keepdims=True) * interest_rate
    fo = w * cp / reward
    pure_pc = 1.0 - np.abs(fo[:-1] - w[1:]).sum(-1) * commission_ratio   # (B-1,1)
    pure_pc = np.concatenate([np.ones((1, 1), np.float32), pure_pc], 0).reshape(B, 1, 1)
    reward = reward * pure_pc + interest
    sr = reward - 1.0
    SR = sr.mean() / sr.std(ddof=1)
    loss = (-np.log(reward)).mean()
    portfolio_value = np.prod(reward, axis=0)                  # (1,1)
    pv_vals, dd, maxb = [], [], 0.0
    for i in range(B):
        pv_vals.append(pv_vals[i - 1] * reward[i, 0, 0] if i > 0 else reward[i, 0, 0])
        if pv_vals[i] > maxb:
            maxb = pv_vals[i]
            dd.append(0.0)
        else:
            dd.append(1.0 - pv_vals[i] / maxb)
    MDD = max(dd)
    return loss, portfolio_value, SR, MDD


if __name__ == "__main__":
    B, M = 8, 12                         # batch (time steps), assets (coin_num + 1)
    commission_ratio = 0.0025
    interest_rate = 0.02 / 250.0

    key = jax.random.PRNGKey(0)
    kw, ky = jax.random.split(key)
    w = jax.nn.softmax(jax.random.normal(kw, (B, 1, M), jnp.float32), axis=-1)
    y = 1.0 + 0.01 * jax.random.normal(ky, (B, M, 1), jnp.float32)

    loss, pv, sr, mdd = batch_loss_pallas(
        w, y, commission_ratio=commission_ratio, interest_rate=interest_rate)
    jax.block_until_ready((loss, pv, sr, mdd))

    r_loss, r_pv, r_sr, r_mdd = batch_loss_reference(
        w, y, commission_ratio, interest_rate)

    # SR divides a tiny mean return by a tiny std, so it amplifies the
    # (validated) approximate-reciprocal / reduction-order noise -> its
    # tolerance is slightly looser than the other outputs.
    assert np.allclose(np.asarray(loss), r_loss, rtol=1e-3, atol=2e-5), (loss, r_loss)
    assert np.allclose(np.asarray(pv), r_pv, rtol=1e-3, atol=2e-5), (pv, r_pv)
    assert np.allclose(np.asarray(sr), r_sr, rtol=2e-3, atol=5e-4), (sr, r_sr)
    assert np.allclose(np.asarray(mdd), r_mdd, rtol=1e-3, atol=2e-5), (mdd, r_mdd)

    print("KERNEL_OK")
</pallas_src>

<mosaic_0001>
module attributes {stable_mosaic.version = 11 : i64} {
  func.func @_batch_loss_kernel(%arg0: memref<8x12xf32, #tpu.memory_space<vmem>>, %arg1: memref<8x12xf32, #tpu.memory_space<vmem>>, %arg2: memref<1x128xf32, #tpu.memory_space<vmem>>) attributes {dimension_semantics = [], scalar_prefetch = 0 : i64, scratch_operands = 0 : i64, tpu.core_type = #tpu.core_type<tc>} {
    %c0 = arith.constant 0 : index
    %c0_0 = arith.constant 0 : index
    %0 = vector.load %arg0[%c0, %c0_0] : memref<8x12xf32, #tpu.memory_space<vmem>>, vector<8x12xf32>
    %c0_1 = arith.constant 0 : index
    %c0_2 = arith.constant 0 : index
    %1 = vector.load %arg1[%c0_1, %c0_2] : memref<8x12xf32, #tpu.memory_space<vmem>>, vector<8x12xf32>
    %2 = tpu.iota {dimensions = array<i32: 0>} : vector<8x1xi32>
    %3 = arith.mulf %0, %1 : vector<8x12xf32>
    %cst = arith.constant dense<0.000000e+00> : vector<8xf32>
    %4 = vector.multi_reduction <add>, %3, %cst [1] : vector<8x12xf32> to vector<8xf32>
    %5 = vector.shape_cast %4 : vector<8xf32> to vector<8x1xf32>
    %cst_3 = arith.constant 0.000000e+00 : f32
    %6 = vector.broadcast %cst_3 : f32 to vector<8x12xf32>
    %7 = arith.minimumf %3, %6 : vector<8x12xf32>
    %cst_4 = arith.constant dense<0.000000e+00> : vector<8xf32>
    %8 = vector.multi_reduction <add>, %7, %cst_4 [1] : vector<8x12xf32> to vector<8xf32>
    %9 = vector.shape_cast %8 : vector<8xf32> to vector<8x1xf32>
    %cst_5 = arith.constant 8.000000e-05 : f32
    %10 = vector.broadcast %cst_5 : f32 to vector<8x1xf32>
    %11 = arith.mulf %9, %10 : vector<8x1xf32>
    %12 = tpu.reciprocal %5 {approx = true} : vector<8x1xf32> -> vector<8x1xf32>
    %13 = vector.broadcast %12 : vector<8x1xf32> to vector<8x12xf32>
    %14 = arith.mulf %3, %13 : vector<8x12xf32>
    %c1_i32 = arith.constant 1 : i32
    %15 = tpu.dynamic_rotate %14 by %c1_i32 dim 0 : vector<8x12xf32>, i32 -> vector<8x12xf32>
    %16 = arith.subf %15, %0 : vector<8x12xf32>
    %17 = math.absf %16 : vector<8x12xf32>
    %cst_6 = arith.constant dense<0.000000e+00> : vector<8xf32>
    %18 = vector.multi_reduction <add>, %17, %cst_6 [1] : vector<8x12xf32> to vector<8xf32>
    %19 = vector.shape_cast %18 : vector<8xf32> to vector<8x1xf32>
    %c0_i32 = arith.constant 0 : i32
    %20 = vector.broadcast %c0_i32 : i32 to vector<8x1xi32>
    %21 = arith.cmpi eq, %2, %20 : vector<8x1xi32>
    %cst_7 = arith.constant 2.500000e-03 : f32
    %22 = vector.broadcast %cst_7 : f32 to vector<8x1xf32>
    %23 = arith.mulf %19, %22 : vector<8x1xf32>
    %cst_8 = arith.constant 1.000000e+00 : f32
    %24 = vector.broadcast %cst_8 : f32 to vector<8x1xf32>
    %25 = arith.subf %24, %23 : vector<8x1xf32>
    %cst_9 = arith.constant 1.000000e+00 : f32
    %26 = vector.broadcast %cst_9 : f32 to vector<8x1xf32>
    %27 = arith.select %21, %26, %25 : vector<8x1xi1>, vector<8x1xf32>
    %28 = arith.mulf %5, %27 : vector<8x1xf32>
    %29 = arith.addf %28, %11 : vector<8x1xf32>
    %30 = math.log %29 : vector<8x1xf32>
    %c1_i32_10 = arith.constant 1 : i32
    %31 = vector.broadcast %c1_i32_10 : i32 to vector<8x1xi32>
    %32 = arith.cmpi sge, %2, %31 : vector<8x1xi32>
    %c1_i32_11 = arith.constant 1 : i32
    %33 = tpu.dynamic_rotate %30 by %c1_i32_11 dim 0 : vector<8x1xf32>, i32 -> vector<8x1xf32>
    %cst_12 = arith.constant 0.000000e+00 : f32
    %34 = vector.broadcast %cst_12 : f32 to vector<8x1xf32>
    %35 = arith.select %32, %33, %34 : vector<8x1xi1>, vector<8x1xf32>
    %c1_i32_13 = arith.constant 1 : i32
    %36 = tpu.dynamic_rotate %30 by %c1_i32_13 dim 0 : vector<8x1xf32>, i32 -> vector<8x1xf32>
    %cst_14 = arith.constant 0xFF800000 : f32
    %37 = vector.broadcast %cst_14 : f32 to vector<8x1xf32>
    %38 = arith.select %32, %36, %37 : vector<8x1xi1>, vector<8x1xf32>
    %39 = arith.addf %35, %30 : vector<8x1xf32>
    %40 = arith.maximumf %38, %39 : vector<8x1xf32>
    %41 = arith.addf %30, %35 : vector<8x1xf32>
    %c2_i32 = arith.constant 2 : i32
    %42 = vector.broadcast %c2_i32 : i32 to vector<8x1xi32>
    %43 = arith.cmpi sge, %2, %42 : vector<8x1xi32>
    %c2_i32_15 = arith.constant 2 : i32
    %44 = tpu.dynamic_rotate %41 by %c2_i32_15 dim 0 : vector<8x1xf32>, i32 -> vector<8x1xf32>
    %cst_16 = arith.constant 0.000000e+00 : f32
    %45 = vector.broadcast %cst_16 : f32 to vector<8x1xf32>
    %46 = arith.select %43, %44, %45 : vector<8x1xi1>, vector<8x1xf32>
    %c2_i32_17 = arith.constant 2 : i32
    %47 = tpu.dynamic_rotate %40 by %c2_i32_17 dim 0 : vector<8x1xf32>, i32 -> vector<8x1xf32>
    %cst_18 = arith.constant 0xFF800000 : f32
    %48 = vector.broadcast %cst_18 : f32 to vector<8x1xf32>
    %49 = arith.select %43, %47, %48 : vector<8x1xi1>, vector<8x1xf32>
    %50 = arith.addf %46, %40 : vector<8x1xf32>
    %51 = arith.maximumf %49, %50 : vector<8x1xf32>
    %52 = arith.addf %41, %46 : vector<8x1xf32>
    %c4_i32 = arith.constant 4 : i32
    %53 = vector.broadcast %c4_i32 : i32 to vector<8x1xi32>
    %54 = arith.cmpi sge, %2, %53 : vector<8x1xi32>
    %c4_i32_19 = arith.constant 4 : i32
    %55 = tpu.dynamic_rotate %52 by %c4_i32_19 dim 0 : vector<8x1xf32>, i32 -> vector<8x1xf32>
    %cst_20 = arith.constant 0.000000e+00 : f32
    %56 = vector.broadcast %cst_20 : f32 to vector<8x1xf32>
    %57 = arith.select %54, %55, %56 : vector<8x1xi1>, vector<8x1xf32>
    %c4_i32_21 = arith.constant 4 : i32
    %58 = tpu.dynamic_rotate %51 by %c4_i32_21 dim 0 : vector<8x1xf32>, i32 -> vector<8x1xf32>
    %cst_22 = arith.constant 0xFF800000 : f32
    %59 = vector.broadcast %cst_22 : f32 to vector<8x1xf32>
    %60 = arith.select %54, %58, %59 : vector<8x1xi1>, vector<8x1xf32>
    %61 = arith.addf %57, %51 : vector<8x1xf32>
    %62 = arith.maximumf %60, %61 : vector<8x1xf32>
    %63 = arith.addf %52, %57 : vector<8x1xf32>
    %64 = vector.extract_strided_slice %63 {offsets = [7, 0], sizes = [1, 1], strides = [1, 1]} : vector<8x1xf32> to vector<1x1xf32>
    %cst_23 = arith.constant 0.000000e+00 : f32
    %65 = vector.broadcast %cst_23 : f32 to vector<1x1xf32>
    %66 = arith.subf %65, %64 : vector<1x1xf32>
    %cst_24 = arith.constant 1.250000e-01 : f32
    %67 = vector.broadcast %cst_24 : f32 to vector<1x1xf32>
    %68 = arith.mulf %66, %67 : vector<1x1xf32>
    %69 = math.exp %64 : vector<1x1xf32>
    %70 = arith.subf %63, %62 : vector<8x1xf32>
    %71 = math.exp %70 : vector<8x1xf32>
    %cst_25 = arith.constant 1.000000e+00 : f32
    %72 = vector.broadcast %cst_25 : f32 to vector<8x1xf32>
    %73 = arith.subf %72, %71 : vector<8x1xf32>
    %cst_26 = arith.constant dense<0xFF800000> : vector<1xf32>
    %74 = vector.multi_reduction <maximumf>, %73, %cst_26 [0] : vector<8x1xf32> to vector<1xf32>
    %75 = vector.shape_cast %74 : vector<1xf32> to vector<1x1xf32>
    %cst_27 = arith.constant 1.000000e+00 : f32
    %76 = vector.broadcast %cst_27 : f32 to vector<8x1xf32>
    %77 = arith.subf %29, %76 : vector<8x1xf32>
    %78 = vector.shape_cast %77 : vector<8x1xf32> to vector<1x8x1xf32>
    %cst_28 = arith.constant dense<0.000000e+00> : vector<1xf32>
    %79 = vector.multi_reduction <add>, %78, %cst_28 [1, 2] : vector<1x8x1xf32> to vector<1xf32>
    %80 = vector.shape_cast %79 : vector<1xf32> to vector<1x1x1xf32>
    %81 = vector.extract %80[0, 0, 0] : f32 from vector<1x1x1xf32>
    %82 = vector.broadcast %81 : f32 to vector<1x1xf32>
    %cst_29 = arith.constant 1.250000e-01 : f32
    %83 = vector.broadcast %cst_29 : f32 to vector<1x1xf32>
    %84 = arith.mulf %82, %83 : vector<1x1xf32>
    %85 = vector.broadcast %84 : vector<1x1xf32> to vector<8x1xf32>
    %86 = arith.subf %77, %85 : vector<8x1xf32>
    %87 = arith.mulf %86, %86 : vector<8x1xf32>
    %88 = vector.shape_cast %87 : vector<8x1xf32> to vector<1x8x1xf32>
    %cst_30 = arith.constant dense<0.000000e+00> : vector<1xf32>
    %89 = vector.multi_reduction <add>, %88, %cst_30 [1, 2] : vector<1x8x1xf32> to vector<1xf32>
    %90 = vector.shape_cast %89 : vector<1xf32> to vector<1x1x1xf32>
    %91 = vector.extract %90[0, 0, 0] : f32 from vector<1x1x1xf32>
    %92 = vector.broadcast %91 : f32 to vector<1x1xf32>
    %cst_31 = arith.constant 0.142857149 : f32
    %93 = vector.broadcast %cst_31 : f32 to vector<1x1xf32>
    %94 = arith.mulf %92, %93 : vector<1x1xf32>
    %95 = math.rsqrt %94 : vector<1x1xf32>
    %96 = arith.mulf %84, %95 : vector<1x1xf32>
    %97 = tpu.iota {dimensions = array<i32: 1>} : vector<1x128xi32>
    %c0_i32_32 = arith.constant 0 : i32
    %98 = vector.broadcast %c0_i32_32 : i32 to vector<1x128xi32>
    %99 = arith.cmpi eq, %97, %98 : vector<1x128xi32>
    %c1_i32_33 = arith.constant 1 : i32
    %100 = vector.broadcast %c1_i32_33 : i32 to vector<1x128xi32>
    %101 = arith.cmpi eq, %97, %100 : vector<1x128xi32>
    %c2_i32_34 = arith.constant 2 : i32
    %102 = vector.broadcast %c2_i32_34 : i32 to vector<1x128xi32>
    %103 = arith.cmpi eq, %97, %102 : vector<1x128xi32>
    %104 = vector.shape_cast %96 : vector<1x1xf32> to vector<1x1xf32>
    %105 = vector.broadcast %104 : vector<1x1xf32> to vector<1x128xf32>
    %106 = vector.shape_cast %75 : vector<1x1xf32> to vector<1x1xf32>
    %107 = vector.broadcast %106 : vector<1x1xf32> to vector<1x128xf32>
    %108 = arith.select %103, %105, %107 : vector<1x128xi1>, vector<1x128xf32>
    %109 = vector.shape_cast %69 : vector<1x1xf32> to vector<1x1xf32>
    %110 = vector.broadcast %109 : vector<1x1xf32> to vector<1x128xf32>
    %111 = arith.select %101, %110, %108 : vector<1x128xi1>, vector<1x128xf32>
    %112 = vector.shape_cast %68 : vector<1x1xf32> to vector<1x1xf32>
    %113 = vector.broadcast %112 : vector<1x1xf32> to vector<1x128xf32>
    %114 = arith.select %99, %113, %111 : vector<1x128xi1>, vector<1x128xf32>
    %c0_35 = arith.constant 0 : index
    %c0_36 = arith.constant 0 : index
    %115 = vector.load %arg2[%c0_35, %c0_36] : memref<1x128xf32, #tpu.memory_space<vmem>>, vector<1x128xf32>
    tpu.vector_store %arg2[%c0_35, %c0_36], %114 {strides = array<i32>} : memref<1x128xf32, #tpu.memory_space<vmem>>, vector<1x128xf32>,
    return
  }
}

</mosaic_0001>

<llo_original>
// kernel: batch_loss_pallas.1
$region0: #{batch_loss_pallas.1}
  #allocation0 [shape = 'u32[]', space=smem, size = 0x4, offset = 0x4, fixed_abs, tag = 'smem constant byte address 0x4 - core index']
  #allocation1 [shape = 'u32[144,128]{1,0:T(1,128)}', space=vmem, size = 0x12000, scoped, tag = 'internal scratch']
  %s0 = inlined_call_operand.hbm [shape: f32[8,12], index: 0, kind: input, shape index: {}]
  %s1 = inlined_call_operand.vmem [shape: f32[8,12], index: 1, kind: input, shape index: {}]
  %s2 = inlined_call_operand.vmem [shape: f32[1,128], index: 2, kind: output, shape index: {}]
  %s3 = sld [smem:[#allocation0]]
  $region22: #{batch_loss_pallas.1} parent=0
    _
  %s5 = ssub.s32 1, %s3
  %s6 = scalar_select 0, %s5, %s3
  $region1: #{batch_loss_pallas.1} parent=0
    #allocation2 [shape = 'u8[4096]{0}', space=vmem, size = 0x1000, scoped, tag = 'input window, operand 0, single buffered']
    #allocation3 [shape = 's32[1]{0}', space=sflag, size = 0x4, scoped, tag = 'scoped memory for batch_loss_pallas.1']
    %7 = vsyncpa [#allocation3], 0
    // Predicated region
    $region2: #{batch_loss_pallas.1} parent=1 // pred_check
      _
    $region3: #{batch_loss_pallas.1} parent=1 // pred_check_branch
      %9 = sbr.rel (0) target = $region5
    $region4: #{batch_loss_pallas.1} parent=1 // pred_region
      %s11 = ssub.s32 128, 128
      %12 = vsyncadd [#allocation3], %s11
      %s14 = sshll.u32 [#allocation2], 4
      %s15 = int_to_ptr.vmem [resolvable:$true] %s14
      %17 = dma.hbm_to_vmem [thread:$0]  %s0, 128, %s15, [#allocation3]
    $region5: #{batch_loss_pallas.1} parent=1 // pred_fallthru
      _
    // Predicated region
    $region6: #{batch_loss_pallas.1} parent=1 // pred_check
      _
    $region7: #{batch_loss_pallas.1} parent=1 // pred_check_branch
      %19 = sbr.rel (0) target = $region9
    $region8: #{batch_loss_pallas.1} parent=1 // pred_region
      _
    $region9: #{batch_loss_pallas.1} parent=1 // pred_fallthru
      _
    // Predicated region
    $region10: #{batch_loss_pallas.1} parent=1 // pred_check
      _
    $region11: #{batch_loss_pallas.1} parent=1 // pred_check_branch
      %21 = sbr.rel (0) target = $region13
    $region12: #{batch_loss_pallas.1} parent=1 // pred_region
      %22 = dma.done [#allocation3], 128
    $region13: #{batch_loss_pallas.1} parent=1 // pred_fallthru
      _
    %v23 = vld [vmem:[#allocation2] sm:$0xff]
    %v24 = vld [vmem:[%s1] sm:$0xff]
    %v25 = vlaneseq
    %v26 = vshrl.u32 %v25, 7
    %v27 = vmul.f32 %v23, %v24
    %vm28 = vcmask 97280
    %v29 = vsel %vm28, %v27, 0.0
    %30 = vadd.xlane.f32.xlu0 %v29
    %v31 = vpop.xlane.xlu0 %30
    %v32 = vmin.f32 %v27, 0.0
    %v33 = vsel %vm28, %v32, 0.0
    %34 = vadd.xlane.f32.xlu0 %v33
    %v35 = vpop.xlane.xlu0 %34
    %v36 = vmul.f32 %v35, 8e-05
    %v37 = vrcp.pop %v31
    %v38 = vmul.f32 %v27, %v37
    %v39 = vrot.slane %v38, 7
    %v40 = vsub.f32 %v39, %v23
    %v41 = vand.u32 2147483647, %v40
    %v42 = vsel %vm28, %v41, 0.0
    %43 = vadd.xlane.f32.xlu0 %v42
    %v44 = vpop.xlane.xlu0 %43
    %vm45 = vcmp.eq.s32.totalorder %v26, 0
    %v46 = vmul.f32 %v44, 0.0025
    %v47 = vsub.f32 1.0, %v46
    %v48 = vsel %vm45, 1.0, %v47
    %v49 = vmul.f32 %v31, %v48
    %v50 = vadd.f32 %v49, %v36
    %v51 = vlog2.pop %v50
    %v52 = vmul.f32 %v51, 0.6931472
    %vm53 = vcmp.ge.s32.totalorder %v26, 1
    %v54 = vrot.slane %v52, 7
    %v55 = vsel %vm53, %v54, 0.0
    %v56 = vsel %vm53, %v54, -inf
    %v57 = vadd.f32 %v55, %v52
    %v58 = vmax.f32 %v56, %v57
    %vm59 = vcmp.ge.s32.totalorder %v26, 2
    %v60 = vrot.slane %v57, 6
    %v61 = vsel %vm59, %v60, 0.0
    %v62 = vrot.slane %v58, 6
    %v63 = vsel %vm59, %v62, -inf
    %v64 = vadd.f32 %v61, %v58
    %v65 = vmax.f32 %v63, %v64
    %v66 = vadd.f32 %v57, %v61
    %vm67 = vcmp.ge.s32.totalorder %v26, 4
    %v68 = vrot.slane %v66, 4
    %v69 = vsel %vm67, %v68, 0.0
    %v70 = vrot.slane %v65, 4
    %v71 = vsel %vm67, %v70, -inf
    %v72 = vadd.f32 %v69, %v65
    %v73 = vmax.f32 %v71, %v72
    %v74 = vadd.f32 %v66, %v69
    %v75 = vsub.f32 0.0, %v74
    %v76 = vmul.f32 %v75, 0.125
    %v77 = vmul.f32 %v74, 1.442695
    %v78 = vpow.pop %v77
    %v79 = vsub.f32 %v74, %v73
    %v80 = vmul.f32 %v79, 1.442695
    %v81 = vpow.pop %v80
    %v82 = vsub.f32 1.0, %v81
    %vm83 = vcmask 7168
    %v84 = vsel %vm83, %v82, -inf
    %v85 = vrot.slane %v84, 4
    %v86 = vmax.f32 %v84, %v85
    %v87 = vrot.slane %v86, 2
    %v88 = vmax.f32 %v86, %v87
    %v89 = vrot.slane %v88, 1
    %v90 = vmax.f32 %v88, %v89
    %v91 = vsub.f32 %v50, 1.0
    %v92 = vsel %vm83, %v91, 0.0
    %93 = vadd.xlane.f32.xlu0 %v92
    %v94 = vpop.xlane.xlu0 %93
    %v95 = vrot.slane %v94, 4
    %v96 = vadd.f32 %v94, %v95
    %v97 = vrot.slane %v96, 2
    %v98 = vadd.f32 %v96, %v97
    %v99 = vrot.slane %v98, 1
    %v100 = vadd.f32 %v98, %v99
    %s101 = vtos %v100
    %v102 = vstv %s101
    %v103 = vmul.f32 %v102, 0.125
    %v104 = vsub.f32 %v91, %v103
    %v105 = vmul.f32 %v104, %v104
    %v106 = vsel %vm83, %v105, 0.0
    %107 = vadd.xlane.f32.xlu0 %v106
    %v108 = vpop.xlane.xlu0 %107
    %v109 = vrot.slane %v108, 4
    %v110 = vadd.f32 %v108, %v109
    %v111 = vrot.slane %v110, 2
    %v112 = vadd.f32 %v110, %v111
    %v113 = vrot.slane %v112, 1
    %v114 = vadd.f32 %v112, %v113
    %s115 = vtos %v114
    %v116 = vstv %s115
    %v117 = vmul.f32 %v116, 0.14285715
    %v118 = vrsqrt.pop %v117
    %v119 = vmul.f32 %v103, %v118
    %v120 = vlaneseq
    %v121 = vand.u32 %v120, 127
    %vm122 = vcmp.eq.s32.totalorder %v121, 0
    %vm123 = vcmp.eq.s32.totalorder %v121, 1
    %vm124 = vcmp.eq.s32.totalorder %v121, 2
    %126 = vset.pattern.permute.xlu0 0
    %127 = vperm.xlu0 %126, %v90
    %v128 = vpop.permute.xlu0 %127
    %v130 = vsel %vm124, %v119, %v128
    %132 = vset.pattern.permute.xlu0 0
    %133 = vperm.xlu0 %132, %v78
    %v134 = vpop.permute.xlu0 %133
    %v136 = vsel %vm123, %v134, %v130
    %138 = vset.pattern.permute.xlu0 0
    %139 = vperm.xlu0 %138, %v76
    %v140 = vpop.permute.xlu0 %139
    %v142 = vsel %vm122, %v140, %v136
    %143 = vst [vmem:[%s2 - $0x7] sm:$0x80] %v142
    // Predicated region
    $region14: #{batch_loss_pallas.1} parent=1 // pred_check
      _
    $region15: #{batch_loss_pallas.1} parent=1 // pred_check_branch
      %145 = sbr.rel (0) target = $region17
    $region16: #{batch_loss_pallas.1} parent=1 // pred_region
      _
    $region17: #{batch_loss_pallas.1} parent=1 // pred_fallthru
      _
    // Predicated region
    $region18: #{batch_loss_pallas.1} parent=1 // pred_check
      _
    $region19: #{batch_loss_pallas.1} parent=1 // pred_check_branch
      %147 = sbr.rel (0) target = $region21
    $region20: #{batch_loss_pallas.1} parent=1 // pred_region
      _
    $region21: #{batch_loss_pallas.1} parent=1 // pred_fallthru
      _
    %148 = vsyncpa [#allocation3], 1

</llo_original>
